<compile_context>
chip_gen: v6e
topology: v6e:2x2x1
jax: 0.10.0
libtpu: 0.0.40
codegen_flags: <defaults>
</compile_context>

<pallas_src>
import jax
import jax.numpy as jnp
from jax.experimental import pallas as pl
from jax.experimental.pallas import tpu as pltpu


def _make_ensemble_kernel(n_backbones, batch, tm):
    def kernel(*refs):
        out_refs = refs[:n_backbones]                    # streaming [tm, Hi] activations
        v_refs = refs[n_backbones:2 * n_backbones]       # resident [1, Hi] folded weights
        c_ref = refs[2 * n_backbones]                    # (1, 1) folded bias in SMEM
        lbl_ref = refs[2 * n_backbones + 1]              # [tm, 1] labels
        logits_ref = refs[2 * n_backbones + 2]           # [tm, 1] logits out
        sqerr_ref = refs[2 * n_backbones + 3]            # [tm, 1] masked squared error out

        i = pl.program_id(0)

        # Fused eval-mode head: logits = sum_i outs_i @ v_i + c  (dropout == identity).
        # Elementwise multiply (VPU) + lane reduce (XLU); no MXU needed.
        acc = None
        for o_ref, v_ref in zip(out_refs, v_refs):
            contrib = jnp.sum(o_ref[...] * v_ref[...], axis=1, keepdims=True)
            acc = contrib if acc is None else acc + contrib
        logits = acc + c_ref[0, 0]                                         # [tm, 1] f32
        logits_ref[...] = logits.astype(logits_ref.dtype)

        # Per-row masked squared error (MSE numerator). Rows past the true batch
        # (ragged last tile reads garbage) are zeroed with a select (NaN-safe).
        row = i * tm + jax.lax.broadcasted_iota(jnp.int32, (tm, 1), 0)
        diff = logits - lbl_ref[...]
        sqerr_ref[...] = jnp.where(row < batch, diff * diff, 0.0)

    return kernel


def _device_vmem_budget_bytes():
    """(streaming budget, vmem_limit_bytes) per TPU generation."""
    try:
        kind = jax.devices()[0].device_kind.lower()
    except Exception:
        kind = ""
    if "v2" in kind or "v3" in kind:
        return 8 << 20, None                 # old chips: tiny VMEM, keep defaults
    if "v5" in kind or "v6" in kind:
        return 96 << 20, 100 << 20           # 128 MiB physical VMEM class
    return 36 << 20, 48 << 20                # v7x / unknown: 64 MiB physical class


def _pick_block_batch(B, feat_dims, block_batch=None):
    if block_batch is not None:
        return int(block_batch)
    budget, _ = _device_vmem_budget_bytes()
    # f32 bytes held per batch row: double-buffered streaming inputs + one
    # elementwise temp + labels/logits/sqerr rows (lane-padded to 128).
    d_pad = sum(-(-h // 128) * 128 for h in feat_dims)
    per_row = 4 * (3 * d_pad + 16)
    tm = min(2048, budget // max(per_row, 1))            # mem-bound: big batch tiles
    tm = max(128, (int(tm) // 128) * 128)
    tm = min(tm, -(-B // 8) * 8)                          # never larger than padded batch
    return max(int(tm), 8)


def ensemble_forward(backbone_outputs, w1, b1, w2, b2, labels, block_batch=None):
    """backbone_outputs: sequence of 2 or 3 pooled outputs [B, Hi];
       w1: [D, Dh], b1: [Dh], w2: [Dh, 1], b2: [1], labels: [B]  (num_labels == 1)."""
    outs = [jnp.asarray(o, jnp.float32) for o in backbone_outputs]
    n = len(outs)
    B = int(outs[0].shape[0])
    feat = [int(o.shape[1]) for o in outs]
    D = sum(feat)
    Dh = int(w1.shape[1])
    num_labels = int(w2.shape[1])
    assert w1.shape == (D, Dh)
    assert num_labels == 1, "only the num_labels == 1 (MSE) branch is implemented"

    tm = _pick_block_batch(B, feat, block_batch)
    num_tiles = -(-B // tm)
    b_pad = num_tiles * tm

    # Fold linear1 -> dropout(identity) -> classifier:  v = W1 @ w2,  c = b1.w2 + b2.
    # Split v per backbone so the concatenated activation never materializes in HBM.
    v = (w1.astype(jnp.float32) @ w2.astype(jnp.float32)).reshape(D)
    v_rows, off = [], 0
    for h in feat:
        v_rows.append(v[off:off + h].reshape(1, h))
        off += h
    c = (jnp.dot(b1.astype(jnp.float32), w2[:, 0].astype(jnp.float32))
         + b2.astype(jnp.float32)[0]).reshape(1, 1)

    lbl = labels.reshape(B, 1).astype(jnp.float32)

    kernel = _make_ensemble_kernel(n, B, tm)
    _, vmem_limit = _device_vmem_budget_bytes()

    cost = pl.CostEstimate(
        flops=int(2 * B * D + 6 * B),
        transcendentals=0,
        bytes_accessed=int(4 * (B * D + B + D + 2 * b_pad + Dh + 2)),
    )

    in_specs = (
        [pl.BlockSpec((tm, h), lambda i: (i, 0)) for h in feat]        # streaming activations
        + [pl.BlockSpec((1, h), lambda i: (0, 0)) for h in feat]       # resident folded weights
        + [pl.BlockSpec(memory_space=pltpu.MemorySpace.SMEM),          # folded scalar bias
           pl.BlockSpec((tm, 1), lambda i: (i, 0))]                    # labels
    )
    out_specs = (
        pl.BlockSpec((tm, 1), lambda i: (i, 0)),                       # logits
        pl.BlockSpec((tm, 1), lambda i: (i, 0)),                       # masked squared error
    )

    logits_pad, sqerr_pad = pl.pallas_call(
        kernel,
        grid=(num_tiles,),
        in_specs=in_specs,
        out_specs=out_specs,
        out_shape=(
            jax.ShapeDtypeStruct((b_pad, 1), jnp.float32),
            jax.ShapeDtypeStruct((b_pad, 1), jnp.float32),
        ),
        compiler_params=pltpu.CompilerParams(
            dimension_semantics=("parallel",),     # no cross-step carry -> megacore-shardable
            vmem_limit_bytes=vmem_limit),
        cost_estimate=cost,
    )(*outs, *v_rows, c, lbl)

    logits = logits_pad[:B]                                            # [B, 1]
    loss = jnp.sum(sqerr_pad) / float(B * num_labels)                  # MSE over B*1 elements
    return loss, logits


if __name__ == "__main__":
    # Two backbone pooled outputs of hidden_size 32 each, num_labels = 1.
    B, H1, H2, NUM_LABELS = 300, 32, 32, 1
    D = H1 + H2
    Dh = D // 2

    key = jax.random.PRNGKey(0)
    k1, k2, k3, k4, k5, k6, k7 = jax.random.split(key, 7)

    output1 = jax.random.normal(k1, (B, H1), dtype=jnp.float32)
    output2 = jax.random.normal(k2, (B, H2), dtype=jnp.float32)
    labels = jax.random.normal(k3, (B,), dtype=jnp.float32)

    # nn.Linear-style uniform(-1/sqrt(fan_in), +1/sqrt(fan_in)) init.
    w1 = jax.random.uniform(k4, (D, Dh), jnp.float32, minval=-1.0, maxval=1.0) / jnp.sqrt(D)
    b1 = jax.random.uniform(k5, (Dh,), jnp.float32, minval=-1.0, maxval=1.0) / jnp.sqrt(D)
    w2 = jax.random.uniform(k6, (Dh, NUM_LABELS), jnp.float32, minval=-1.0, maxval=1.0) / jnp.sqrt(Dh)
    b2 = jax.random.uniform(k7, (NUM_LABELS,), jnp.float32, minval=-1.0, maxval=1.0) / jnp.sqrt(Dh)

    # Pure-JAX f32 reference (eval-mode dropout == identity).
    cat = jnp.concatenate([output1, output2], axis=1)
    h_ref = cat @ w1 + b1
    logits_ref = h_ref @ w2 + b2
    loss_ref = jnp.mean((logits_ref.reshape(-1) - labels.reshape(-1)) ** 2)

    # 1) Auto tile size (single batch tile at this small B).
    loss, logits = ensemble_forward([output1, output2], w1, b1, w2, b2, labels)
    jax.block_until_ready((loss, logits))
    assert logits.shape == (B, NUM_LABELS)
    assert jnp.allclose(logits, logits_ref, atol=1e-3, rtol=1e-3)
    assert jnp.allclose(loss, loss_ref, atol=1e-3, rtol=1e-3)

    # 2) Forced small tile to exercise the multi-step grid + ragged last block mask.
    loss2, logits2 = ensemble_forward([output1, output2], w1, b1, w2, b2, labels,
                                      block_batch=128)
    jax.block_until_ready((loss2, logits2))
    assert jnp.allclose(logits2, logits_ref, atol=1e-3, rtol=1e-3)
    assert jnp.allclose(loss2, loss_ref, atol=1e-3, rtol=1e-3)

    print("KERNEL_OK")
</pallas_src>

<mosaic_0001>
module attributes {stable_mosaic.version = 11 : i64} {
  func.func @kernel(%arg0: i32, %arg1: memref<304x32xf32, #tpu.memory_space<vmem>>, %arg2: memref<304x32xf32, #tpu.memory_space<vmem>>, %arg3: memref<1x32xf32, #tpu.memory_space<vmem>>, %arg4: memref<1x32xf32, #tpu.memory_space<vmem>>, %arg5: memref<1x1xf32, #tpu.memory_space<smem>>, %arg6: memref<304x1xf32, #tpu.memory_space<vmem>>, %arg7: memref<304x1xf32, #tpu.memory_space<vmem>>, %arg8: memref<304x1xf32, #tpu.memory_space<vmem>>) attributes {dimension_semantics = [#tpu.dimension_semantics<parallel>], iteration_bounds = array<i64: 1>, scalar_prefetch = 0 : i64, scratch_operands = 0 : i64, tpu.core_type = #tpu.core_type<tc>, window_params = [{transform_indices = @transform_0, window_bounds = array<i64: 304, 32>}, {transform_indices = @transform_1, window_bounds = array<i64: 304, 32>}, {pipeline_mode = #tpu.pipeline_mode<synchronous>, transform_indices = @transform_2, window_bounds = array<i64: 1, 32>}, {pipeline_mode = #tpu.pipeline_mode<synchronous>, transform_indices = @transform_3, window_bounds = array<i64: 1, 32>}, {transform_indices = @transform_4, window_bounds = array<i64: 1, 1>}, {transform_indices = @transform_5, window_bounds = array<i64: 304, 1>}, {transform_indices = @transform_6, window_bounds = array<i64: 304, 1>}, {transform_indices = @transform_7, window_bounds = array<i64: 304, 1>}]} {
    %c0 = arith.constant 0 : index
    %c0_0 = arith.constant 0 : index
    %0 = vector.load %arg1[%c0, %c0_0] : memref<304x32xf32, #tpu.memory_space<vmem>>, vector<304x32xf32>
    %c0_1 = arith.constant 0 : index
    %c0_2 = arith.constant 0 : index
    %1 = vector.load %arg3[%c0_1, %c0_2] : memref<1x32xf32, #tpu.memory_space<vmem>>, vector<1x32xf32>
    %2 = vector.broadcast %1 : vector<1x32xf32> to vector<304x32xf32>
    %3 = arith.mulf %0, %2 : vector<304x32xf32>
    %cst = arith.constant dense<0.000000e+00> : vector<304xf32>
    %4 = vector.multi_reduction <add>, %3, %cst [1] : vector<304x32xf32> to vector<304xf32>
    %5 = vector.shape_cast %4 : vector<304xf32> to vector<304x1xf32>
    %c0_3 = arith.constant 0 : index
    %c0_4 = arith.constant 0 : index
    %6 = vector.load %arg2[%c0_3, %c0_4] : memref<304x32xf32, #tpu.memory_space<vmem>>, vector<304x32xf32>
    %c0_5 = arith.constant 0 : index
    %c0_6 = arith.constant 0 : index
    %7 = vector.load %arg4[%c0_5, %c0_6] : memref<1x32xf32, #tpu.memory_space<vmem>>, vector<1x32xf32>
    %8 = vector.broadcast %7 : vector<1x32xf32> to vector<304x32xf32>
    %9 = arith.mulf %6, %8 : vector<304x32xf32>
    %cst_7 = arith.constant dense<0.000000e+00> : vector<304xf32>
    %10 = vector.multi_reduction <add>, %9, %cst_7 [1] : vector<304x32xf32> to vector<304xf32>
    %11 = vector.shape_cast %10 : vector<304xf32> to vector<304x1xf32>
    %12 = arith.addf %5, %11 : vector<304x1xf32>
    %c0_8 = arith.constant 0 : index
    %c0_9 = arith.constant 0 : index
    %13 = memref.load %arg5[%c0_8, %c0_9] : memref<1x1xf32, #tpu.memory_space<smem>>
    %14 = vector.broadcast %13 : f32 to vector<304x1xf32>
    %15 = arith.addf %12, %14 : vector<304x1xf32>
    %c0_10 = arith.constant 0 : index
    %c0_11 = arith.constant 0 : index
    %16 = vector.load %arg7[%c0_10, %c0_11] : memref<304x1xf32, #tpu.memory_space<vmem>>, vector<304x1xf32>
    tpu.vector_store %arg7[%c0_10, %c0_11], %15 {strides = array<i32>} : memref<304x1xf32, #tpu.memory_space<vmem>>, vector<304x1xf32>,
    %c304_i32 = arith.constant 304 : i32
    %17 = arith.muli %arg0, %c304_i32 : i32
    %18 = tpu.iota {dimensions = array<i32: 0>} : vector<304x1xi32>
    %19 = vector.broadcast %17 : i32 to vector<304x1xi32>
    %20 = arith.addi %19, %18 : vector<304x1xi32>
    %c0_12 = arith.constant 0 : index
    %c0_13 = arith.constant 0 : index
    %21 = vector.load %arg6[%c0_12, %c0_13] : memref<304x1xf32, #tpu.memory_space<vmem>>, vector<304x1xf32>
    %22 = arith.subf %15, %21 : vector<304x1xf32>
    %c300_i32 = arith.constant 300 : i32
    %23 = vector.broadcast %c300_i32 : i32 to vector<304x1xi32>
    %24 = arith.cmpi slt, %20, %23 : vector<304x1xi32>
    %25 = arith.mulf %22, %22 : vector<304x1xf32>
    %cst_14 = arith.constant 0.000000e+00 : f32
    %26 = vector.broadcast %cst_14 : f32 to vector<304x1xf32>
    %27 = arith.select %24, %25, %26 : vector<304x1xi1>, vector<304x1xf32>
    %c0_15 = arith.constant 0 : index
    %c0_16 = arith.constant 0 : index
    %28 = vector.load %arg8[%c0_15, %c0_16] : memref<304x1xf32, #tpu.memory_space<vmem>>, vector<304x1xf32>
    tpu.vector_store %arg8[%c0_15, %c0_16], %27 {strides = array<i32>} : memref<304x1xf32, #tpu.memory_space<vmem>>, vector<304x1xf32>,
    return
  }
  func.func @transform_0(%arg0: i32) -> (i32, i32) {
    %c0_i32 = arith.constant 0 : i32
    %c0_i32_0 = arith.constant 0 : i32
    return %arg0, %c0_i32 : i32, i32
  }
  func.func @transform_1(%arg0: i32) -> (i32, i32) {
    %c0_i32 = arith.constant 0 : i32
    %c0_i32_0 = arith.constant 0 : i32
    return %arg0, %c0_i32 : i32, i32
  }
  func.func @transform_2(%arg0: i32) -> (i32, i32) {
    %c0_i32 = arith.constant 0 : i32
    %c0_i32_0 = arith.constant 0 : i32
    %c0_i32_1 = arith.constant 0 : i32
    return %c0_i32, %c0_i32_0 : i32, i32
  }
  func.func @transform_3(%arg0: i32) -> (i32, i32) {
    %c0_i32 = arith.constant 0 : i32
    %c0_i32_0 = arith.constant 0 : i32
    %c0_i32_1 = arith.constant 0 : i32
    return %c0_i32, %c0_i32_0 : i32, i32
  }
  func.func @transform_4(%arg0: i32) -> (i32, i32) {
    %c0_i32 = arith.constant 0 : i32
    %c0_i32_0 = arith.constant 0 : i32
    %c0_i32_1 = arith.constant 0 : i32
    return %c0_i32, %c0_i32_0 : i32, i32
  }
  func.func @transform_5(%arg0: i32) -> (i32, i32) {
    %c0_i32 = arith.constant 0 : i32
    %c0_i32_0 = arith.constant 0 : i32
    return %arg0, %c0_i32 : i32, i32
  }
  func.func @transform_6(%arg0: i32) -> (i32, i32) {
    %c0_i32 = arith.constant 0 : i32
    %c0_i32_0 = arith.constant 0 : i32
    return %arg0, %c0_i32 : i32, i32
  }
  func.func @transform_7(%arg0: i32) -> (i32, i32) {
    %c0_i32 = arith.constant 0 : i32
    %c0_i32_0 = arith.constant 0 : i32
    return %arg0, %c0_i32 : i32, i32
  }
}

</mosaic_0001>

<llo_original>
// kernel: tpu_custom_call.1
$region0: #{tpu_custom_call.1}
  #allocation0 [shape = 'u32[]', space=smem, size = 0x4, offset = 0x4, fixed_abs, tag = 'smem constant byte address 0x4 - core index']
  #allocation1 [shape = 'u32[144,128]{1,0:T(1,128)}', space=vmem, size = 0x12000, scoped, tag = 'internal scratch']
  #allocation2 [shape = 'f32[1,1]{1,0:T(1,128)S(6)}', space=smem, size = 0x200, scoped, tag = 'scoped memory for tpu_custom_call.1']
  %s0 = inlined_call_operand.vmem [shape: f32[300,32], index: 0, kind: input, shape index: {}]
  %s1 = inlined_call_operand.vmem [shape: f32[300,32], index: 1, kind: input, shape index: {}]
  %s2 = inlined_call_operand.vmem [shape: f32[1,32], index: 2, kind: input, shape index: {}]
  %s3 = inlined_call_operand.vmem [shape: f32[1,32], index: 3, kind: input, shape index: {}]
  %s4 = inlined_call_operand.<no memory space> [shape: f32[1,1], index: 4, kind: input, shape index: {}]
  %s5 = inlined_call_operand.vmem [shape: f32[300,1], index: 5, kind: input, shape index: {}]
  %s6 = inlined_call_operand.vmem [shape: f32[304,1], index: 6, kind: output, shape index: {0}]
  %s7 = inlined_call_operand.vmem [shape: f32[304,1], index: 7, kind: output, shape index: {1}]
  %8 = xla_tuple %s6, %s7
  %s9 = sld [smem:[#allocation0]]
  $region42: #{tpu_custom_call.1} parent=0
    _
  %s11 = ssub.s32 1, %s9
  %s12 = scalar_select 0, %s11, %s9
  %13 = sst [smem:[#allocation2]] %s4
  // Predicated region
  $region2: #{tpu_custom_call.1} parent=0 // pred_check
    _
  $region3: #{tpu_custom_call.1} parent=0 // pred_check_branch
    %15 = sbr.rel (0) target = $region5
  $region4: #{tpu_custom_call.1} parent=0 // pred_region
    _
  $region5: #{tpu_custom_call.1} parent=0 // pred_fallthru
    _
  // Predicated region
  $region6: #{tpu_custom_call.1} parent=0 // pred_check
    _
  $region7: #{tpu_custom_call.1} parent=0 // pred_check_branch
    %17 = sbr.rel (0) target = $region9
  $region8: #{tpu_custom_call.1} parent=0 // pred_region
    _
  $region9: #{tpu_custom_call.1} parent=0 // pred_fallthru
    _
  // Predicated region
  $region10: #{tpu_custom_call.1} parent=0 // pred_check
    _
  $region11: #{tpu_custom_call.1} parent=0 // pred_check_branch
    %19 = sbr.rel (0) target = $region13
  $region12: #{tpu_custom_call.1} parent=0 // pred_region
    _
  $region13: #{tpu_custom_call.1} parent=0 // pred_fallthru
    _
  // Predicated region
  $region14: #{tpu_custom_call.1} parent=0 // pred_check
    _
  $region15: #{tpu_custom_call.1} parent=0 // pred_check_branch
    %21 = sbr.rel (0) target = $region17
  $region16: #{tpu_custom_call.1} parent=0 // pred_region
    _
  $region17: #{tpu_custom_call.1} parent=0 // pred_fallthru
    _
  // Predicated region
  $region18: #{tpu_custom_call.1} parent=0 // pred_check
    _
  $region19: #{tpu_custom_call.1} parent=0 // pred_check_branch
    %23 = sbr.rel (0) target = $region21
  $region20: #{tpu_custom_call.1} parent=0 // pred_region
    _
  $region21: #{tpu_custom_call.1} parent=0 // pred_fallthru
    _
  // Predicated region
  $region22: #{tpu_custom_call.1} parent=0 // pred_check
    _
  $region23: #{tpu_custom_call.1} parent=0 // pred_check_branch
    %25 = sbr.rel (0) target = $region25
  $region24: #{tpu_custom_call.1} parent=0 // pred_region
    _
  $region25: #{tpu_custom_call.1} parent=0 // pred_fallthru
    _
  %v26 = vld [vmem:[%s0] sm:$0xff]
  %v27 = vld [vmem:[%s0 + $0x8] sm:$0xff]
  %v28 = vld [vmem:[%s0 + $0x10] sm:$0xff]
  %v29 = vld [vmem:[%s0 + $0x18] sm:$0xff]
  %v30 = vld [vmem:[%s0 + $0x20] sm:$0xff]
  %v31 = vld [vmem:[%s0 + $0x28] sm:$0xff]
  %v32 = vld [vmem:[%s0 + $0x30] sm:$0xff]
  %v33 = vld [vmem:[%s0 + $0x38] sm:$0xff]
  %v34 = vld [vmem:[%s0 + $0x40] sm:$0xff]
  %v35 = vld [vmem:[%s0 + $0x48] sm:$0xff]
  %v36 = vld [vmem:[%s0 + $0x50] sm:$0xff]
  %v37 = vld [vmem:[%s0 + $0x58] sm:$0xff]
  %v38 = vld [vmem:[%s0 + $0x60] sm:$0xff]
  %v39 = vld [vmem:[%s0 + $0x68] sm:$0xff]
  %v40 = vld [vmem:[%s0 + $0x70] sm:$0xff]
  %v41 = vld [vmem:[%s0 + $0x78] sm:$0xff]
  %v42 = vld [vmem:[%s0 + $0x80] sm:$0xff]
  %v43 = vld [vmem:[%s0 + $0x88] sm:$0xff]
  %v44 = vld [vmem:[%s0 + $0x90] sm:$0xff]
  %v45 = vld [vmem:[%s0 + $0x98] sm:$0xff]
  %v46 = vld [vmem:[%s0 + $0xa0] sm:$0xff]
  %v47 = vld [vmem:[%s0 + $0xa8] sm:$0xff]
  %v48 = vld [vmem:[%s0 + $0xb0] sm:$0xff]
  %v49 = vld [vmem:[%s0 + $0xb8] sm:$0xff]
  %v50 = vld [vmem:[%s0 + $0xc0] sm:$0xff]
  %v51 = vld [vmem:[%s0 + $0xc8] sm:$0xff]
  %v52 = vld [vmem:[%s0 + $0xd0] sm:$0xff]
  %v53 = vld [vmem:[%s0 + $0xd8] sm:$0xff]
  %v54 = vld [vmem:[%s0 + $0xe0] sm:$0xff]
  %v55 = vld [vmem:[%s0 + $0xe8] sm:$0xff]
  %v56 = vld [vmem:[%s0 + $0xf0] sm:$0xff]
  %v57 = vld [vmem:[%s0 + $0xf8] sm:$0xff]
  %v58 = vld [vmem:[%s0 + $0x100] sm:$0xff]
  %v59 = vld [vmem:[%s0 + $0x108] sm:$0xff]
  %v60 = vld [vmem:[%s0 + $0x110] sm:$0xff]
  %v61 = vld [vmem:[%s0 + $0x118] sm:$0xff]
  %v62 = vld [vmem:[%s0 + $0x120] sm:$0xff]
  %v63 = vld [vmem:[%s0 + $0x128] sm:$0xff]
  %v64 = vld [vmem:[%s2] sm:$0x1]
  %v66 = vlaneseq
  %v67 = vshrl.u32 %v66, 7
  %v68 = vsub.s32 0, %v67
  %v69 = vrot.slane %v64, %v68
  %v71 = vmul.f32 %v26, %v69
  %v72 = vmul.f32 %v27, %v69
  %v73 = vmul.f32 %v28, %v69
  %v74 = vmul.f32 %v29, %v69
  %v75 = vmul.f32 %v30, %v69
  %v76 = vmul.f32 %v31, %v69
  %v77 = vmul.f32 %v32, %v69
  %v78 = vmul.f32 %v33, %v69
  %v79 = vmul.f32 %v34, %v69
  %v80 = vmul.f32 %v35, %v69
  %v81 = vmul.f32 %v36, %v69
  %v82 = vmul.f32 %v37, %v69
  %v83 = vmul.f32 %v38, %v69
  %v84 = vmul.f32 %v39, %v69
  %v85 = vmul.f32 %v40, %v69
  %v86 = vmul.f32 %v41, %v69
  %v87 = vmul.f32 %v42, %v69
  %v88 = vmul.f32 %v43, %v69
  %v89 = vmul.f32 %v44, %v69
  %v90 = vmul.f32 %v45, %v69
  %v91 = vmul.f32 %v46, %v69
  %v92 = vmul.f32 %v47, %v69
  %v93 = vmul.f32 %v48, %v69
  %v94 = vmul.f32 %v49, %v69
  %v95 = vmul.f32 %v50, %v69
  %v96 = vmul.f32 %v51, %v69
  %v97 = vmul.f32 %v52, %v69
  %v98 = vmul.f32 %v53, %v69
  %v99 = vmul.f32 %v54, %v69
  %v100 = vmul.f32 %v55, %v69
  %v101 = vmul.f32 %v56, %v69
  %v102 = vmul.f32 %v57, %v69
  %v103 = vmul.f32 %v58, %v69
  %v104 = vmul.f32 %v59, %v69
  %v105 = vmul.f32 %v60, %v69
  %v106 = vmul.f32 %v61, %v69
  %v107 = vmul.f32 %v62, %v69
  %v108 = vmul.f32 %v63, %v69
  %vm109 = vcmask 261120
  %v110 = vsel %vm109, %v71, 0.0
  %111 = vadd.xlane.f32.xlu0 %v110
  %v112 = vpop.xlane.xlu0 %111
  %v113 = vsel %vm109, %v72, 0.0
  %114 = vadd.xlane.f32.xlu0 %v113
  %v115 = vpop.xlane.xlu0 %114
  %v116 = vsel %vm109, %v73, 0.0
  %117 = vadd.xlane.f32.xlu0 %v116
  %v118 = vpop.xlane.xlu0 %117
  %v119 = vsel %vm109, %v74, 0.0
  %120 = vadd.xlane.f32.xlu0 %v119
  %v121 = vpop.xlane.xlu0 %120
  %v122 = vsel %vm109, %v75, 0.0
  %123 = vadd.xlane.f32.xlu0 %v122
  %v124 = vpop.xlane.xlu0 %123
  %v125 = vsel %vm109, %v76, 0.0
  %126 = vadd.xlane.f32.xlu0 %v125
  %v127 = vpop.xlane.xlu0 %126
  %v128 = vsel %vm109, %v77, 0.0
  %129 = vadd.xlane.f32.xlu0 %v128
  %v130 = vpop.xlane.xlu0 %129
  %v131 = vsel %vm109, %v78, 0.0
  %132 = vadd.xlane.f32.xlu0 %v131
  %v133 = vpop.xlane.xlu0 %132
  %v134 = vsel %vm109, %v79, 0.0
  %135 = vadd.xlane.f32.xlu0 %v134
  %v136 = vpop.xlane.xlu0 %135
  %v137 = vsel %vm109, %v80, 0.0
  %138 = vadd.xlane.f32.xlu0 %v137
  %v139 = vpop.xlane.xlu0 %138
  %v140 = vsel %vm109, %v81, 0.0
  %141 = vadd.xlane.f32.xlu0 %v140
  %v142 = vpop.xlane.xlu0 %141
  %v143 = vsel %vm109, %v82, 0.0
  %144 = vadd.xlane.f32.xlu0 %v143
  %v145 = vpop.xlane.xlu0 %144
  %v146 = vsel %vm109, %v83, 0.0
  %147 = vadd.xlane.f32.xlu0 %v146
  %v148 = vpop.xlane.xlu0 %147
  %v149 = vsel %vm109, %v84, 0.0
  %150 = vadd.xlane.f32.xlu0 %v149
  %v151 = vpop.xlane.xlu0 %150
  %v152 = vsel %vm109, %v85, 0.0
  %153 = vadd.xlane.f32.xlu0 %v152
  %v154 = vpop.xlane.xlu0 %153
  %v155 = vsel %vm109, %v86, 0.0
  %156 = vadd.xlane.f32.xlu0 %v155
  %v157 = vpop.xlane.xlu0 %156
  %v158 = vsel %vm109, %v87, 0.0
  %159 = vadd.xlane.f32.xlu0 %v158
  %v160 = vpop.xlane.xlu0 %159
  %v161 = vsel %vm109, %v88, 0.0
  %162 = vadd.xlane.f32.xlu0 %v161
  %v163 = vpop.xlane.xlu0 %162
  %v164 = vsel %vm109, %v89, 0.0
  %165 = vadd.xlane.f32.xlu0 %v164
  %v166 = vpop.xlane.xlu0 %165
  %v167 = vsel %vm109, %v90, 0.0
  %168 = vadd.xlane.f32.xlu0 %v167
  %v169 = vpop.xlane.xlu0 %168
  %v170 = vsel %vm109, %v91, 0.0
  %171 = vadd.xlane.f32.xlu0 %v170
  %v172 = vpop.xlane.xlu0 %171
  %v173 = vsel %vm109, %v92, 0.0
  %174 = vadd.xlane.f32.xlu0 %v173
  %v175 = vpop.xlane.xlu0 %174
  %v176 = vsel %vm109, %v93, 0.0
  %177 = vadd.xlane.f32.xlu0 %v176
  %v178 = vpop.xlane.xlu0 %177
  %v179 = vsel %vm109, %v94, 0.0
  %180 = vadd.xlane.f32.xlu0 %v179
  %v181 = vpop.xlane.xlu0 %180
  %v182 = vsel %vm109, %v95, 0.0
  %183 = vadd.xlane.f32.xlu0 %v182
  %v184 = vpop.xlane.xlu0 %183
  %v185 = vsel %vm109, %v96, 0.0
  %186 = vadd.xlane.f32.xlu0 %v185
  %v187 = vpop.xlane.xlu0 %186
  %v188 = vsel %vm109, %v97, 0.0
  %189 = vadd.xlane.f32.xlu0 %v188
  %v190 = vpop.xlane.xlu0 %189
  %v191 = vsel %vm109, %v98, 0.0
  %192 = vadd.xlane.f32.xlu0 %v191
  %v193 = vpop.xlane.xlu0 %192
  %v194 = vsel %vm109, %v99, 0.0
  %195 = vadd.xlane.f32.xlu0 %v194
  %v196 = vpop.xlane.xlu0 %195
  %v197 = vsel %vm109, %v100, 0.0
  %198 = vadd.xlane.f32.xlu0 %v197
  %v199 = vpop.xlane.xlu0 %198
  %v200 = vsel %vm109, %v101, 0.0
  %201 = vadd.xlane.f32.xlu0 %v200
  %v202 = vpop.xlane.xlu0 %201
  %v203 = vsel %vm109, %v102, 0.0
  %204 = vadd.xlane.f32.xlu0 %v203
  %v205 = vpop.xlane.xlu0 %204
  %v206 = vsel %vm109, %v103, 0.0
  %207 = vadd.xlane.f32.xlu0 %v206
  %v208 = vpop.xlane.xlu0 %207
  %v209 = vsel %vm109, %v104, 0.0
  %210 = vadd.xlane.f32.xlu0 %v209
  %v211 = vpop.xlane.xlu0 %210
  %v212 = vsel %vm109, %v105, 0.0
  %213 = vadd.xlane.f32.xlu0 %v212
  %v214 = vpop.xlane.xlu0 %213
  %v215 = vsel %vm109, %v106, 0.0
  %216 = vadd.xlane.f32.xlu0 %v215
  %v217 = vpop.xlane.xlu0 %216
  %v218 = vsel %vm109, %v107, 0.0
  %219 = vadd.xlane.f32.xlu0 %v218
  %v220 = vpop.xlane.xlu0 %219
  %v221 = vsel %vm109, %v108, 0.0
  %222 = vadd.xlane.f32.xlu0 %v221
  %v223 = vpop.xlane.xlu0 %222
  %v224 = vld [vmem:[%s1] sm:$0xff]
  %v225 = vld [vmem:[%s1 + $0x8] sm:$0xff]
  %v226 = vld [vmem:[%s1 + $0x10] sm:$0xff]
  %v227 = vld [vmem:[%s1 + $0x18] sm:$0xff]
  %v228 = vld [vmem:[%s1 + $0x20] sm:$0xff]
  %v229 = vld [vmem:[%s1 + $0x28] sm:$0xff]
  %v230 = vld [vmem:[%s1 + $0x30] sm:$0xff]
  %v231 = vld [vmem:[%s1 + $0x38] sm:$0xff]
  %v232 = vld [vmem:[%s1 + $0x40] sm:$0xff]
  %v233 = vld [vmem:[%s1 + $0x48] sm:$0xff]
  %v234 = vld [vmem:[%s1 + $0x50] sm:$0xff]
  %v235 = vld [vmem:[%s1 + $0x58] sm:$0xff]
  %v236 = vld [vmem:[%s1 + $0x60] sm:$0xff]
  %v237 = vld [vmem:[%s1 + $0x68] sm:$0xff]
  %v238 = vld [vmem:[%s1 + $0x70] sm:$0xff]
  %v239 = vld [vmem:[%s1 + $0x78] sm:$0xff]
  %v240 = vld [vmem:[%s1 + $0x80] sm:$0xff]
  %v241 = vld [vmem:[%s1 + $0x88] sm:$0xff]
  %v242 = vld [vmem:[%s1 + $0x90] sm:$0xff]
  %v243 = vld [vmem:[%s1 + $0x98] sm:$0xff]
  %v244 = vld [vmem:[%s1 + $0xa0] sm:$0xff]
  %v245 = vld [vmem:[%s1 + $0xa8] sm:$0xff]
  %v246 = vld [vmem:[%s1 + $0xb0] sm:$0xff]
  %v247 = vld [vmem:[%s1 + $0xb8] sm:$0xff]
  %v248 = vld [vmem:[%s1 + $0xc0] sm:$0xff]
  %v249 = vld [vmem:[%s1 + $0xc8] sm:$0xff]
  %v250 = vld [vmem:[%s1 + $0xd0] sm:$0xff]
  %v251 = vld [vmem:[%s1 + $0xd8] sm:$0xff]
  %v252 = vld [vmem:[%s1 + $0xe0] sm:$0xff]
  %v253 = vld [vmem:[%s1 + $0xe8] sm:$0xff]
  %v254 = vld [vmem:[%s1 + $0xf0] sm:$0xff]
  %v255 = vld [vmem:[%s1 + $0xf8] sm:$0xff]
  %v256 = vld [vmem:[%s1 + $0x100] sm:$0xff]
  %v257 = vld [vmem:[%s1 + $0x108] sm:$0xff]
  %v258 = vld [vmem:[%s1 + $0x110] sm:$0xff]
  %v259 = vld [vmem:[%s1 + $0x118] sm:$0xff]
  %v260 = vld [vmem:[%s1 + $0x120] sm:$0xff]
  %v261 = vld [vmem:[%s1 + $0x128] sm:$0xff]
  %v262 = vld [vmem:[%s3] sm:$0x1]
  %v264 = vlaneseq
  %v265 = vshrl.u32 %v264, 7
  %v266 = vsub.s32 0, %v265
  %v267 = vrot.slane %v262, %v266
  %v269 = vmul.f32 %v224, %v267
  %v270 = vmul.f32 %v225, %v267
  %v271 = vmul.f32 %v226, %v267
  %v272 = vmul.f32 %v227, %v267
  %v273 = vmul.f32 %v228, %v267
  %v274 = vmul.f32 %v229, %v267
  %v275 = vmul.f32 %v230, %v267
  %v276 = vmul.f32 %v231, %v267
  %v277 = vmul.f32 %v232, %v267
  %v278 = vmul.f32 %v233, %v267
  %v279 = vmul.f32 %v234, %v267
  %v280 = vmul.f32 %v235, %v267
  %v281 = vmul.f32 %v236, %v267
  %v282 = vmul.f32 %v237, %v267
  %v283 = vmul.f32 %v238, %v267
  %v284 = vmul.f32 %v239, %v267
  %v285 = vmul.f32 %v240, %v267
  %v286 = vmul.f32 %v241, %v267
  %v287 = vmul.f32 %v242, %v267
  %v288 = vmul.f32 %v243, %v267
  %v289 = vmul.f32 %v244, %v267
  %v290 = vmul.f32 %v245, %v267
  %v291 = vmul.f32 %v246, %v267
  %v292 = vmul.f32 %v247, %v267
  %v293 = vmul.f32 %v248, %v267
  %v294 = vmul.f32 %v249, %v267
  %v295 = vmul.f32 %v250, %v267
  %v296 = vmul.f32 %v251, %v267
  %v297 = vmul.f32 %v252, %v267
  %v298 = vmul.f32 %v253, %v267
  %v299 = vmul.f32 %v254, %v267
  %v300 = vmul.f32 %v255, %v267
  %v301 = vmul.f32 %v256, %v267
  %v302 = vmul.f32 %v257, %v267
  %v303 = vmul.f32 %v258, %v267
  %v304 = vmul.f32 %v259, %v267
  %v305 = vmul.f32 %v260, %v267
  %v306 = vmul.f32 %v261, %v267
  %v307 = vsel %vm109, %v269, 0.0
  %308 = vadd.xlane.f32.xlu0 %v307
  %v309 = vpop.xlane.xlu0 %308
  %v310 = vsel %vm109, %v270, 0.0
  %311 = vadd.xlane.f32.xlu0 %v310
  %v312 = vpop.xlane.xlu0 %311
  %v313 = vsel %vm109, %v271, 0.0
  %314 = vadd.xlane.f32.xlu0 %v313
  %v315 = vpop.xlane.xlu0 %314
  %v316 = vsel %vm109, %v272, 0.0
  %317 = vadd.xlane.f32.xlu0 %v316
  %v318 = vpop.xlane.xlu0 %317
  %v319 = vsel %vm109, %v273, 0.0
  %320 = vadd.xlane.f32.xlu0 %v319
  %v321 = vpop.xlane.xlu0 %320
  %v322 = vsel %vm109, %v274, 0.0
  %323 = vadd.xlane.f32.xlu0 %v322
  %v324 = vpop.xlane.xlu0 %323
  %v325 = vsel %vm109, %v275, 0.0
  %326 = vadd.xlane.f32.xlu0 %v325
  %v327 = vpop.xlane.xlu0 %326
  %v328 = vsel %vm109, %v276, 0.0
  %329 = vadd.xlane.f32.xlu0 %v328
  %v330 = vpop.xlane.xlu0 %329
  %v331 = vsel %vm109, %v277, 0.0
  %332 = vadd.xlane.f32.xlu0 %v331
  %v333 = vpop.xlane.xlu0 %332
  %v334 = vsel %vm109, %v278, 0.0
  %335 = vadd.xlane.f32.xlu0 %v334
  %v336 = vpop.xlane.xlu0 %335
  %v337 = vsel %vm109, %v279, 0.0
  %338 = vadd.xlane.f32.xlu0 %v337
  %v339 = vpop.xlane.xlu0 %338
  %v340 = vsel %vm109, %v280, 0.0
  %341 = vadd.xlane.f32.xlu0 %v340
  %v342 = vpop.xlane.xlu0 %341
  %v343 = vsel %vm109, %v281, 0.0
  %344 = vadd.xlane.f32.xlu0 %v343
  %v345 = vpop.xlane.xlu0 %344
  %v346 = vsel %vm109, %v282, 0.0
  %347 = vadd.xlane.f32.xlu0 %v346
  %v348 = vpop.xlane.xlu0 %347
  %v349 = vsel %vm109, %v283, 0.0
  %350 = vadd.xlane.f32.xlu0 %v349
  %v351 = vpop.xlane.xlu0 %350
  %v352 = vsel %vm109, %v284, 0.0
  %353 = vadd.xlane.f32.xlu0 %v352
  %v354 = vpop.xlane.xlu0 %353
  %v355 = vsel %vm109, %v285, 0.0
  %356 = vadd.xlane.f32.xlu0 %v355
  %v357 = vpop.xlane.xlu0 %356
  %v358 = vsel %vm109, %v286, 0.0
  %359 = vadd.xlane.f32.xlu0 %v358
  %v360 = vpop.xlane.xlu0 %359
  %v361 = vsel %vm109, %v287, 0.0
  %362 = vadd.xlane.f32.xlu0 %v361
  %v363 = vpop.xlane.xlu0 %362
  %v364 = vsel %vm109, %v288, 0.0
  %365 = vadd.xlane.f32.xlu0 %v364
  %v366 = vpop.xlane.xlu0 %365
  %v367 = vsel %vm109, %v289, 0.0
  %368 = vadd.xlane.f32.xlu0 %v367
  %v369 = vpop.xlane.xlu0 %368
  %v370 = vsel %vm109, %v290, 0.0
  %371 = vadd.xlane.f32.xlu0 %v370
  %v372 = vpop.xlane.xlu0 %371
  %v373 = vsel %vm109, %v291, 0.0
  %374 = vadd.xlane.f32.xlu0 %v373
  %v375 = vpop.xlane.xlu0 %374
  %v376 = vsel %vm109, %v292, 0.0
  %377 = vadd.xlane.f32.xlu0 %v376
  %v378 = vpop.xlane.xlu0 %377
  %v379 = vsel %vm109, %v293, 0.0
  %380 = vadd.xlane.f32.xlu0 %v379
  %v381 = vpop.xlane.xlu0 %380
  %v382 = vsel %vm109, %v294, 0.0
  %383 = vadd.xlane.f32.xlu0 %v382
  %v384 = vpop.xlane.xlu0 %383
  %v385 = vsel %vm109, %v295, 0.0
  %386 = vadd.xlane.f32.xlu0 %v385
  %v387 = vpop.xlane.xlu0 %386
  %v388 = vsel %vm109, %v296, 0.0
  %389 = vadd.xlane.f32.xlu0 %v388
  %v390 = vpop.xlane.xlu0 %389
  %v391 = vsel %vm109, %v297, 0.0
  %392 = vadd.xlane.f32.xlu0 %v391
  %v393 = vpop.xlane.xlu0 %392
  %v394 = vsel %vm109, %v298, 0.0
  %395 = vadd.xlane.f32.xlu0 %v394
  %v396 = vpop.xlane.xlu0 %395
  %v397 = vsel %vm109, %v299, 0.0
  %398 = vadd.xlane.f32.xlu0 %v397
  %v399 = vpop.xlane.xlu0 %398
  %v400 = vsel %vm109, %v300, 0.0
  %401 = vadd.xlane.f32.xlu0 %v400
  %v402 = vpop.xlane.xlu0 %401
  %v403 = vsel %vm109, %v301, 0.0
  %404 = vadd.xlane.f32.xlu0 %v403
  %v405 = vpop.xlane.xlu0 %404
  %v406 = vsel %vm109, %v302, 0.0
  %407 = vadd.xlane.f32.xlu0 %v406
  %v408 = vpop.xlane.xlu0 %407
  %v409 = vsel %vm109, %v303, 0.0
  %410 = vadd.xlane.f32.xlu0 %v409
  %v411 = vpop.xlane.xlu0 %410
  %v412 = vsel %vm109, %v304, 0.0
  %413 = vadd.xlane.f32.xlu0 %v412
  %v414 = vpop.xlane.xlu0 %413
  %v415 = vsel %vm109, %v305, 0.0
  %416 = vadd.xlane.f32.xlu0 %v415
  %v417 = vpop.xlane.xlu0 %416
  %v418 = vsel %vm109, %v306, 0.0
  %419 = vadd.xlane.f32.xlu0 %v418
  %v420 = vpop.xlane.xlu0 %419
  %v421 = vadd.f32 %v112, %v309
  %v422 = vadd.f32 %v115, %v312
  %v423 = vadd.f32 %v118, %v315
  %v424 = vadd.f32 %v121, %v318
  %v425 = vadd.f32 %v124, %v321
  %v426 = vadd.f32 %v127, %v324
  %v427 = vadd.f32 %v130, %v327
  %v428 = vadd.f32 %v133, %v330
  %v429 = vadd.f32 %v136, %v333
  %v430 = vadd.f32 %v139, %v336
  %v431 = vadd.f32 %v142, %v339
  %v432 = vadd.f32 %v145, %v342
  %v433 = vadd.f32 %v148, %v345
  %v434 = vadd.f32 %v151, %v348
  %v435 = vadd.f32 %v154, %v351
  %v436 = vadd.f32 %v157, %v354
  %v437 = vadd.f32 %v160, %v357
  %v438 = vadd.f32 %v163, %v360
  %v439 = vadd.f32 %v166, %v363
  %v440 = vadd.f32 %v169, %v366
  %v441 = vadd.f32 %v172, %v369
  %v442 = vadd.f32 %v175, %v372
  %v443 = vadd.f32 %v178, %v375
  %v444 = vadd.f32 %v181, %v378
  %v445 = vadd.f32 %v184, %v381
  %v446 = vadd.f32 %v187, %v384
  %v447 = vadd.f32 %v190, %v387
  %v448 = vadd.f32 %v193, %v390
  %v449 = vadd.f32 %v196, %v393
  %v450 = vadd.f32 %v199, %v396
  %v451 = vadd.f32 %v202, %v399
  %v452 = vadd.f32 %v205, %v402
  %v453 = vadd.f32 %v208, %v405
  %v454 = vadd.f32 %v211, %v408
  %v455 = vadd.f32 %v214, %v411
  %v456 = vadd.f32 %v217, %v414
  %v457 = vadd.f32 %v220, %v417
  %v458 = vadd.f32 %v223, %v420
  %s459 = sld [smem:[#allocation2]]
  %v460 = vstv %s459
  %v461 = vadd.f32 %v421, %v460
  %v462 = vadd.f32 %v422, %v460
  %v463 = vadd.f32 %v423, %v460
  %v464 = vadd.f32 %v424, %v460
  %v465 = vadd.f32 %v425, %v460
  %v466 = vadd.f32 %v426, %v460
  %v467 = vadd.f32 %v427, %v460
  %v468 = vadd.f32 %v428, %v460
  %v469 = vadd.f32 %v429, %v460
  %v470 = vadd.f32 %v430, %v460
  %v471 = vadd.f32 %v431, %v460
  %v472 = vadd.f32 %v432, %v460
  %v473 = vadd.f32 %v433, %v460
  %v474 = vadd.f32 %v434, %v460
  %v475 = vadd.f32 %v435, %v460
  %v476 = vadd.f32 %v436, %v460
  %v477 = vadd.f32 %v437, %v460
  %v478 = vadd.f32 %v438, %v460
  %v479 = vadd.f32 %v439, %v460
  %v480 = vadd.f32 %v440, %v460
  %v481 = vadd.f32 %v441, %v460
  %v482 = vadd.f32 %v442, %v460
  %v483 = vadd.f32 %v443, %v460
  %v484 = vadd.f32 %v444, %v460
  %v485 = vadd.f32 %v445, %v460
  %v486 = vadd.f32 %v446, %v460
  %v487 = vadd.f32 %v447, %v460
  %v488 = vadd.f32 %v448, %v460
  %v489 = vadd.f32 %v449, %v460
  %v490 = vadd.f32 %v450, %v460
  %v491 = vadd.f32 %v451, %v460
  %v492 = vadd.f32 %v452, %v460
  %v493 = vadd.f32 %v453, %v460
  %v494 = vadd.f32 %v454, %v460
  %v495 = vadd.f32 %v455, %v460
  %v496 = vadd.f32 %v456, %v460
  %v497 = vadd.f32 %v457, %v460
  %v498 = vadd.f32 %v458, %v460
  %vm499 = vcmask 7168
  %500 = vst.msk [vmem:[%s6] sm:$0xff] %vm499, %v461
  %501 = vst.msk [vmem:[%s6 + $0x8] sm:$0xff] %vm499, %v462
  %502 = vst.msk [vmem:[%s6 + $0x10] sm:$0xff] %vm499, %v463
  %503 = vst.msk [vmem:[%s6 + $0x18] sm:$0xff] %vm499, %v464
  %504 = vst.msk [vmem:[%s6 + $0x20] sm:$0xff] %vm499, %v465
  %505 = vst.msk [vmem:[%s6 + $0x28] sm:$0xff] %vm499, %v466
  %506 = vst.msk [vmem:[%s6 + $0x30] sm:$0xff] %vm499, %v467
  %507 = vst.msk [vmem:[%s6 + $0x38] sm:$0xff] %vm499, %v468
  %508 = vst.msk [vmem:[%s6 + $0x40] sm:$0xff] %vm499, %v469
  %509 = vst.msk [vmem:[%s6 + $0x48] sm:$0xff] %vm499, %v470
  %510 = vst.msk [vmem:[%s6 + $0x50] sm:$0xff] %vm499, %v471
  %511 = vst.msk [vmem:[%s6 + $0x58] sm:$0xff] %vm499, %v472
  %512 = vst.msk [vmem:[%s6 + $0x60] sm:$0xff] %vm499, %v473
  %513 = vst.msk [vmem:[%s6 + $0x68] sm:$0xff] %vm499, %v474
  %514 = vst.msk [vmem:[%s6 + $0x70] sm:$0xff] %vm499, %v475
  %515 = vst.msk [vmem:[%s6 + $0x78] sm:$0xff] %vm499, %v476
  %516 = vst.msk [vmem:[%s6 + $0x80] sm:$0xff] %vm499, %v477
  %517 = vst.msk [vmem:[%s6 + $0x88] sm:$0xff] %vm499, %v478
  %518 = vst.msk [vmem:[%s6 + $0x90] sm:$0xff] %vm499, %v479
  %519 = vst.msk [vmem:[%s6 + $0x98] sm:$0xff] %vm499, %v480
  %520 = vst.msk [vmem:[%s6 + $0xa0] sm:$0xff] %vm499, %v481
  %521 = vst.msk [vmem:[%s6 + $0xa8] sm:$0xff] %vm499, %v482
  %522 = vst.msk [vmem:[%s6 + $0xb0] sm:$0xff] %vm499, %v483
  %523 = vst.msk [vmem:[%s6 + $0xb8] sm:$0xff] %vm499, %v484
  %524 = vst.msk [vmem:[%s6 + $0xc0] sm:$0xff] %vm499, %v485
  %525 = vst.msk [vmem:[%s6 + $0xc8] sm:$0xff] %vm499, %v486
  %526 = vst.msk [vmem:[%s6 + $0xd0] sm:$0xff] %vm499, %v487
  %527 = vst.msk [vmem:[%s6 + $0xd8] sm:$0xff] %vm499, %v488
  %528 = vst.msk [vmem:[%s6 + $0xe0] sm:$0xff] %vm499, %v489
  %529 = vst.msk [vmem:[%s6 + $0xe8] sm:$0xff] %vm499, %v490
  %530 = vst.msk [vmem:[%s6 + $0xf0] sm:$0xff] %vm499, %v491
  %531 = vst.msk [vmem:[%s6 + $0xf8] sm:$0xff] %vm499, %v492
  %532 = vst.msk [vmem:[%s6 + $0x100] sm:$0xff] %vm499, %v493
  %533 = vst.msk [vmem:[%s6 + $0x108] sm:$0xff] %vm499, %v494
  %534 = vst.msk [vmem:[%s6 + $0x110] sm:$0xff] %vm499, %v495
  %535 = vst.msk [vmem:[%s6 + $0x118] sm:$0xff] %vm499, %v496
  %536 = vst.msk [vmem:[%s6 + $0x120] sm:$0xff] %vm499, %v497
  %537 = vst.msk [vmem:[%s6 + $0x128] sm:$0xff] %vm499, %v498
  %s538 = smul.u32 0, 304
  %v539 = vlaneseq
  %v540 = vshrl.u32 %v539, 7
  %v541 = vadd.s32 %v540, 8
  %v542 = vadd.s32 %v540, 16
  %v543 = vadd.s32 %v540, 24
  %v544 = vadd.s32 %v540, 32
  %v545 = vadd.s32 %v540, 40
  %v546 = vadd.s32 %v540, 48
  %v547 = vadd.s32 %v540, 56
  %v548 = vadd.s32 %v540, 64
  %v549 = vadd.s32 %v540, 72
  %v550 = vadd.s32 %v540, 80
  %v551 = vadd.s32 %v540, 88
  %v552 = vadd.s32 %v540, 96
  %v553 = vadd.s32 %v540, 104
  %v554 = vadd.s32 %v540, 112
  %v555 = vadd.s32 %v540, 120
  %v556 = vadd.s32 %v540, 128
  %v557 = vadd.s32 %v540, 136
  %v558 = vadd.s32 %v540, 144
  %v559 = vadd.s32 %v540, 152
  %v560 = vadd.s32 %v540, 160
  %v561 = vadd.s32 %v540, 168
  %v562 = vadd.s32 %v540, 176
  %v563 = vadd.s32 %v540, 184
  %v564 = vadd.s32 %v540, 192
  %v565 = vadd.s32 %v540, 200
  %v566 = vadd.s32 %v540, 208
  %v567 = vadd.s32 %v540, 216
  %v568 = vadd.s32 %v540, 224
  %v569 = vadd.s32 %v540, 232
  %v570 = vadd.s32 %v540, 240
  %v571 = vadd.s32 %v540, 248
  %v572 = vadd.s32 %v540, 256
  %v573 = vadd.s32 %v540, 264
  %v574 = vadd.s32 %v540, 272
  %v575 = vadd.s32 %v540, 280
  %v576 = vadd.s32 %v540, 288
  %v577 = vadd.s32 %v540, 296
  %v578 = vstv %s538
  %v579 = vadd.s32 %v578, %v540
  %v580 = vadd.s32 %v578, %v541
  %v581 = vadd.s32 %v578, %v542
  %v582 = vadd.s32 %v578, %v543
  %v583 = vadd.s32 %v578, %v544
  %v584 = vadd.s32 %v578, %v545
  %v585 = vadd.s32 %v578, %v546
  %v586 = vadd.s32 %v578, %v547
  %v587 = vadd.s32 %v578, %v548
  %v588 = vadd.s32 %v578, %v549
  %v589 = vadd.s32 %v578, %v550
  %v590 = vadd.s32 %v578, %v551
  %v591 = vadd.s32 %v578, %v552
  %v592 = vadd.s32 %v578, %v553
  %v593 = vadd.s32 %v578, %v554
  %v594 = vadd.s32 %v578, %v555
  %v595 = vadd.s32 %v578, %v556
  %v596 = vadd.s32 %v578, %v557
  %v597 = vadd.s32 %v578, %v558
  %v598 = vadd.s32 %v578, %v559
  %v599 = vadd.s32 %v578, %v560
  %v600 = vadd.s32 %v578, %v561
  %v601 = vadd.s32 %v578, %v562
  %v602 = vadd.s32 %v578, %v563
  %v603 = vadd.s32 %v578, %v564
  %v604 = vadd.s32 %v578, %v565
  %v605 = vadd.s32 %v578, %v566
  %v606 = vadd.s32 %v578, %v567
  %v607 = vadd.s32 %v578, %v568
  %v608 = vadd.s32 %v578, %v569
  %v609 = vadd.s32 %v578, %v570
  %v610 = vadd.s32 %v578, %v571
  %v611 = vadd.s32 %v578, %v572
  %v612 = vadd.s32 %v578, %v573
  %v613 = vadd.s32 %v578, %v574
  %v614 = vadd.s32 %v578, %v575
  %v615 = vadd.s32 %v578, %v576
  %v616 = vadd.s32 %v578, %v577
  %v617 = vld [vmem:[%s5] sm:$0xff]
  %v618 = vld [vmem:[%s5 + $0x8] sm:$0xff]
  %v619 = vld [vmem:[%s5 + $0x10] sm:$0xff]
  %v620 = vld [vmem:[%s5 + $0x18] sm:$0xff]
  %v621 = vld [vmem:[%s5 + $0x20] sm:$0xff]
  %v622 = vld [vmem:[%s5 + $0x28] sm:$0xff]
  %v623 = vld [vmem:[%s5 + $0x30] sm:$0xff]
  %v624 = vld [vmem:[%s5 + $0x38] sm:$0xff]
  %v625 = vld [vmem:[%s5 + $0x40] sm:$0xff]
  %v626 = vld [vmem:[%s5 + $0x48] sm:$0xff]
  %v627 = vld [vmem:[%s5 + $0x50] sm:$0xff]
  %v628 = vld [vmem:[%s5 + $0x58] sm:$0xff]
  %v629 = vld [vmem:[%s5 + $0x60] sm:$0xff]
  %v630 = vld [vmem:[%s5 + $0x68] sm:$0xff]
  %v631 = vld [vmem:[%s5 + $0x70] sm:$0xff]
  %v632 = vld [vmem:[%s5 + $0x78] sm:$0xff]
  %v633 = vld [vmem:[%s5 + $0x80] sm:$0xff]
  %v634 = vld [vmem:[%s5 + $0x88] sm:$0xff]
  %v635 = vld [vmem:[%s5 + $0x90] sm:$0xff]
  %v636 = vld [vmem:[%s5 + $0x98] sm:$0xff]
  %v637 = vld [vmem:[%s5 + $0xa0] sm:$0xff]
  %v638 = vld [vmem:[%s5 + $0xa8] sm:$0xff]
  %v639 = vld [vmem:[%s5 + $0xb0] sm:$0xff]
  %v640 = vld [vmem:[%s5 + $0xb8] sm:$0xff]
  %v641 = vld [vmem:[%s5 + $0xc0] sm:$0xff]
  %v642 = vld [vmem:[%s5 + $0xc8] sm:$0xff]
  %v643 = vld [vmem:[%s5 + $0xd0] sm:$0xff]
  %v644 = vld [vmem:[%s5 + $0xd8] sm:$0xff]
  %v645 = vld [vmem:[%s5 + $0xe0] sm:$0xff]
  %v646 = vld [vmem:[%s5 + $0xe8] sm:$0xff]
  %v647 = vld [vmem:[%s5 + $0xf0] sm:$0xff]
  %v648 = vld [vmem:[%s5 + $0xf8] sm:$0xff]
  %v649 = vld [vmem:[%s5 + $0x100] sm:$0xff]
  %v650 = vld [vmem:[%s5 + $0x108] sm:$0xff]
  %v651 = vld [vmem:[%s5 + $0x110] sm:$0xff]
  %v652 = vld [vmem:[%s5 + $0x118] sm:$0xff]
  %v653 = vld [vmem:[%s5 + $0x120] sm:$0xff]
  %v654 = vld [vmem:[%s5 + $0x128] sm:$0xff]
  %v655 = vsub.f32 %v461, %v617
  %v656 = vsub.f32 %v462, %v618
  %v657 = vsub.f32 %v463, %v619
  %v658 = vsub.f32 %v464, %v620
  %v659 = vsub.f32 %v465, %v621
  %v660 = vsub.f32 %v466, %v622
  %v661 = vsub.f32 %v467, %v623
  %v662 = vsub.f32 %v468, %v624
  %v663 = vsub.f32 %v469, %v625
  %v664 = vsub.f32 %v470, %v626
  %v665 = vsub.f32 %v471, %v627
  %v666 = vsub.f32 %v472, %v628
  %v667 = vsub.f32 %v473, %v629
  %v668 = vsub.f32 %v474, %v630
  %v669 = vsub.f32 %v475, %v631
  %v670 = vsub.f32 %v476, %v632
  %v671 = vsub.f32 %v477, %v633
  %v672 = vsub.f32 %v478, %v634
  %v673 = vsub.f32 %v479, %v635
  %v674 = vsub.f32 %v480, %v636
  %v675 = vsub.f32 %v481, %v637
  %v676 = vsub.f32 %v482, %v638
  %v677 = vsub.f32 %v483, %v639
  %v678 = vsub.f32 %v484, %v640
  %v679 = vsub.f32 %v485, %v641
  %v680 = vsub.f32 %v486, %v642
  %v681 = vsub.f32 %v487, %v643
  %v682 = vsub.f32 %v488, %v644
  %v683 = vsub.f32 %v489, %v645
  %v684 = vsub.f32 %v490, %v646
  %v685 = vsub.f32 %v491, %v647
  %v686 = vsub.f32 %v492, %v648
  %v687 = vsub.f32 %v493, %v649
  %v688 = vsub.f32 %v494, %v650
  %v689 = vsub.f32 %v495, %v651
  %v690 = vsub.f32 %v496, %v652
  %v691 = vsub.f32 %v497, %v653
  %v692 = vsub.f32 %v498, %v654
  %vm693 = vcmp.lt.s32.totalorder %v579, 300
  %vm694 = vcmp.lt.s32.totalorder %v580, 300
  %vm695 = vcmp.lt.s32.totalorder %v581, 300
  %vm696 = vcmp.lt.s32.totalorder %v582, 300
  %vm697 = vcmp.lt.s32.totalorder %v583, 300
  %vm698 = vcmp.lt.s32.totalorder %v584, 300
  %vm699 = vcmp.lt.s32.totalorder %v585, 300
  %vm700 = vcmp.lt.s32.totalorder %v586, 300
  %vm701 = vcmp.lt.s32.totalorder %v587, 300
  %vm702 = vcmp.lt.s32.totalorder %v588, 300
  %vm703 = vcmp.lt.s32.totalorder %v589, 300
  %vm704 = vcmp.lt.s32.totalorder %v590, 300
  %vm705 = vcmp.lt.s32.totalorder %v591, 300
  %vm706 = vcmp.lt.s32.totalorder %v592, 300
  %vm707 = vcmp.lt.s32.totalorder %v593, 300
  %vm708 = vcmp.lt.s32.totalorder %v594, 300
  %vm709 = vcmp.lt.s32.totalorder %v595, 300
  %vm710 = vcmp.lt.s32.totalorder %v596, 300
  %vm711 = vcmp.lt.s32.totalorder %v597, 300
  %vm712 = vcmp.lt.s32.totalorder %v598, 300
  %vm713 = vcmp.lt.s32.totalorder %v599, 300
  %vm714 = vcmp.lt.s32.totalorder %v600, 300
  %vm715 = vcmp.lt.s32.totalorder %v601, 300
  %vm716 = vcmp.lt.s32.totalorder %v602, 300
  %vm717 = vcmp.lt.s32.totalorder %v603, 300
  %vm718 = vcmp.lt.s32.totalorder %v604, 300
  %vm719 = vcmp.lt.s32.totalorder %v605, 300
  %vm720 = vcmp.lt.s32.totalorder %v606, 300
  %vm721 = vcmp.lt.s32.totalorder %v607, 300
  %vm722 = vcmp.lt.s32.totalorder %v608, 300
  %vm723 = vcmp.lt.s32.totalorder %v609, 300
  %vm724 = vcmp.lt.s32.totalorder %v610, 300
  %vm725 = vcmp.lt.s32.totalorder %v611, 300
  %vm726 = vcmp.lt.s32.totalorder %v612, 300
  %vm727 = vcmp.lt.s32.totalorder %v613, 300
  %vm728 = vcmp.lt.s32.totalorder %v614, 300
  %vm729 = vcmp.lt.s32.totalorder %v615, 300
  %vm730 = vcmp.lt.s32.totalorder %v616, 300
  %v731 = vmul.f32 %v655, %v655
  %v732 = vmul.f32 %v656, %v656
  %v733 = vmul.f32 %v657, %v657
  %v734 = vmul.f32 %v658, %v658
  %v735 = vmul.f32 %v659, %v659
  %v736 = vmul.f32 %v660, %v660
  %v737 = vmul.f32 %v661, %v661
  %v738 = vmul.f32 %v662, %v662
  %v739 = vmul.f32 %v663, %v663
  %v740 = vmul.f32 %v664, %v664
  %v741 = vmul.f32 %v665, %v665
  %v742 = vmul.f32 %v666, %v666
  %v743 = vmul.f32 %v667, %v667
  %v744 = vmul.f32 %v668, %v668
  %v745 = vmul.f32 %v669, %v669
  %v746 = vmul.f32 %v670, %v670
  %v747 = vmul.f32 %v671, %v671
  %v748 = vmul.f32 %v672, %v672
  %v749 = vmul.f32 %v673, %v673
  %v750 = vmul.f32 %v674, %v674
  %v751 = vmul.f32 %v675, %v675
  %v752 = vmul.f32 %v676, %v676
  %v753 = vmul.f32 %v677, %v677
  %v754 = vmul.f32 %v678, %v678
  %v755 = vmul.f32 %v679, %v679
  %v756 = vmul.f32 %v680, %v680
  %v757 = vmul.f32 %v681, %v681
  %v758 = vmul.f32 %v682, %v682
  %v759 = vmul.f32 %v683, %v683
  %v760 = vmul.f32 %v684, %v684
  %v761 = vmul.f32 %v685, %v685
  %v762 = vmul.f32 %v686, %v686
  %v763 = vmul.f32 %v687, %v687
  %v764 = vmul.f32 %v688, %v688
  %v765 = vmul.f32 %v689, %v689
  %v766 = vmul.f32 %v690, %v690
  %v767 = vmul.f32 %v691, %v691
  %v768 = vmul.f32 %v692, %v692
  %v769 = vsel %vm693, %v731, 0.0
  %v770 = vsel %vm694, %v732, 0.0
  %v771 = vsel %vm695, %v733, 0.0
  %v772 = vsel %vm696, %v734, 0.0
  %v773 = vsel %vm697, %v735, 0.0
  %v774 = vsel %vm698, %v736, 0.0
  %v775 = vsel %vm699, %v737, 0.0
  %v776 = vsel %vm700, %v738, 0.0
  %v777 = vsel %vm701, %v739, 0.0
  %v778 = vsel %vm702, %v740, 0.0
  %v779 = vsel %vm703, %v741, 0.0
  %v780 = vsel %vm704, %v742, 0.0
  %v781 = vsel %vm705, %v743, 0.0
  %v782 = vsel %vm706, %v744, 0.0
  %v783 = vsel %vm707, %v745, 0.0
  %v784 = vsel %vm708, %v746, 0.0
  %v785 = vsel %vm709, %v747, 0.0
  %v786 = vsel %vm710, %v748, 0.0
  %v787 = vsel %vm711, %v749, 0.0
  %v788 = vsel %vm712, %v750, 0.0
  %v789 = vsel %vm713, %v751, 0.0
  %v790 = vsel %vm714, %v752, 0.0
  %v791 = vsel %vm715, %v753, 0.0
  %v792 = vsel %vm716, %v754, 0.0
  %v793 = vsel %vm717, %v755, 0.0
  %v794 = vsel %vm718, %v756, 0.0
  %v795 = vsel %vm719, %v757, 0.0
  %v796 = vsel %vm720, %v758, 0.0
  %v797 = vsel %vm721, %v759, 0.0
  %v798 = vsel %vm722, %v760, 0.0
  %v799 = vsel %vm723, %v761, 0.0
  %v800 = vsel %vm724, %v762, 0.0
  %v801 = vsel %vm725, %v763, 0.0
  %v802 = vsel %vm726, %v764, 0.0
  %v803 = vsel %vm727, %v765, 0.0
  %v804 = vsel %vm728, %v766, 0.0
  %v805 = vsel %vm729, %v767, 0.0
  %v806 = vsel %vm730, %v768, 0.0
  %807 = vst.msk [vmem:[%s7] sm:$0xff] %vm499, %v769
  %808 = vst.msk [vmem:[%s7 + $0x8] sm:$0xff] %vm499, %v770
  %809 = vst.msk [vmem:[%s7 + $0x10] sm:$0xff] %vm499, %v771
  %810 = vst.msk [vmem:[%s7 + $0x18] sm:$0xff] %vm499, %v772
  %811 = vst.msk [vmem:[%s7 + $0x20] sm:$0xff] %vm499, %v773
  %812 = vst.msk [vmem:[%s7 + $0x28] sm:$0xff] %vm499, %v774
  %813 = vst.msk [vmem:[%s7 + $0x30] sm:$0xff] %vm499, %v775
  %814 = vst.msk [vmem:[%s7 + $0x38] sm:$0xff] %vm499, %v776
  %815 = vst.msk [vmem:[%s7 + $0x40] sm:$0xff] %vm499, %v777
  %816 = vst.msk [vmem:[%s7 + $0x48] sm:$0xff] %vm499, %v778
  %817 = vst.msk [vmem:[%s7 + $0x50] sm:$0xff] %vm499, %v779
  %818 = vst.msk [vmem:[%s7 + $0x58] sm:$0xff] %vm499, %v780
  %819 = vst.msk [vmem:[%s7 + $0x60] sm:$0xff] %vm499, %v781
  %820 = vst.msk [vmem:[%s7 + $0x68] sm:$0xff] %vm499, %v782
  %821 = vst.msk [vmem:[%s7 + $0x70] sm:$0xff] %vm499, %v783
  %822 = vst.msk [vmem:[%s7 + $0x78] sm:$0xff] %vm499, %v784
  %823 = vst.msk [vmem:[%s7 + $0x80] sm:$0xff] %vm499, %v785
  %824 = vst.msk [vmem:[%s7 + $0x88] sm:$0xff] %vm499, %v786
  %825 = vst.msk [vmem:[%s7 + $0x90] sm:$0xff] %vm499, %v787
  %826 = vst.msk [vmem:[%s7 + $0x98] sm:$0xff] %vm499, %v788
  %827 = vst.msk [vmem:[%s7 + $0xa0] sm:$0xff] %vm499, %v789
  %828 = vst.msk [vmem:[%s7 + $0xa8] sm:$0xff] %vm499, %v790
  %829 = vst.msk [vmem:[%s7 + $0xb0] sm:$0xff] %vm499, %v791
  %830 = vst.msk [vmem:[%s7 + $0xb8] sm:$0xff] %vm499, %v792
  %831 = vst.msk [vmem:[%s7 + $0xc0] sm:$0xff] %vm499, %v793
  %832 = vst.msk [vmem:[%s7 + $0xc8] sm:$0xff] %vm499, %v794
  %833 = vst.msk [vmem:[%s7 + $0xd0] sm:$0xff] %vm499, %v795
  %834 = vst.msk [vmem:[%s7 + $0xd8] sm:$0xff] %vm499, %v796
  %835 = vst.msk [vmem:[%s7 + $0xe0] sm:$0xff] %vm499, %v797
  %836 = vst.msk [vmem:[%s7 + $0xe8] sm:$0xff] %vm499, %v798
  %837 = vst.msk [vmem:[%s7 + $0xf0] sm:$0xff] %vm499, %v799
  %838 = vst.msk [vmem:[%s7 + $0xf8] sm:$0xff] %vm499, %v800
  %839 = vst.msk [vmem:[%s7 + $0x100] sm:$0xff] %vm499, %v801
  %840 = vst.msk [vmem:[%s7 + $0x108] sm:$0xff] %vm499, %v802
  %841 = vst.msk [vmem:[%s7 + $0x110] sm:$0xff] %vm499, %v803
  %842 = vst.msk [vmem:[%s7 + $0x118] sm:$0xff] %vm499, %v804
  %843 = vst.msk [vmem:[%s7 + $0x120] sm:$0xff] %vm499, %v805
  %844 = vst.msk [vmem:[%s7 + $0x128] sm:$0xff] %vm499, %v806
  // Predicated region
  $region26: #{tpu_custom_call.1} parent=0 // pred_check
    _
  $region27: #{tpu_custom_call.1} parent=0 // pred_check_branch
    %846 = sbr.rel (0) target = $region29
  $region28: #{tpu_custom_call.1} parent=0 // pred_region
    _
  $region29: #{tpu_custom_call.1} parent=0 // pred_fallthru
    _
  // Predicated region
  $region30: #{tpu_custom_call.1} parent=0 // pred_check
    _
  $region31: #{tpu_custom_call.1} parent=0 // pred_check_branch
    %848 = sbr.rel (0) target = $region33
  $region32: #{tpu_custom_call.1} parent=0 // pred_region
    _
  $region33: #{tpu_custom_call.1} parent=0 // pred_fallthru
    _
  // Predicated region
  $region34: #{tpu_custom_call.1} parent=0 // pred_check
    _
  $region35: #{tpu_custom_call.1} parent=0 // pred_check_branch
    %850 = sbr.rel (0) target = $region37
  $region36: #{tpu_custom_call.1} parent=0 // pred_region
    _
  $region37: #{tpu_custom_call.1} parent=0 // pred_fallthru
    _
  // Predicated region
  $region38: #{tpu_custom_call.1} parent=0 // pred_check
    _
  $region39: #{tpu_custom_call.1} parent=0 // pred_check_branch
    %852 = sbr.rel (0) target = $region41
  $region40: #{tpu_custom_call.1} parent=0 // pred_region
    _
  $region41: #{tpu_custom_call.1} parent=0 // pred_fallthru
    _

</llo_original>
